<compile_context>
chip_gen: v6e
topology: v6e:2x2x1
jax: 0.10.0
libtpu: 0.0.40
codegen_flags: <defaults>
</compile_context>

<pallas_src>
import math
import functools

import jax
import jax.numpy as jnp
from jax.experimental import pallas as pl
from jax.experimental.pallas import tpu as pltpu


def _leaky_relu(y):
    # torch.nn.LeakyReLU() default negative_slope = 0.01 (f32 math).
    return jnp.where(y >= 0.0, y, 0.01 * y)


def fcn_kernel(x_ref, w1_ref, b1_ref, w2_ref, b2_ref, w3_ref, b3_ref,
               wc_ref, bc_ref, o_ref, *, seq_len, batches_per_tile):
    # x tile: (TM, H) rows == `batches_per_tile` whole batches of `seq_len` tokens.
    x = x_ref[...].astype(jnp.float32)                      # cast once

    def linear_leaky(h, w_ref, b_ref):
        # bf16 MXU operands, f32 accumulation; bias + activation in f32.
        y = jnp.dot(h.astype(jnp.bfloat16), w_ref[...],
                    preferred_element_type=jnp.float32)
        return _leaky_relu(y + b_ref[...].astype(jnp.float32))

    # TODO(synk): Dropout is inference-mode identity (no RNG mask generated).
    h = linear_leaky(x, w1_ref, b1_ref)
    h = linear_leaky(h, w2_ref, b2_ref)
    h = linear_leaky(h, w3_ref, b3_ref)

    # Residual + mean over the sequence axis, streamed per tile.
    hidden = x.shape[-1]
    res = (h + x).reshape(batches_per_tile, seq_len, hidden)
    pooled = jnp.sum(res, axis=1) * (1.0 / seq_len)          # (BB, H), true S

    logits = jnp.dot(pooled.astype(jnp.bfloat16), wc_ref[...],
                     preferred_element_type=jnp.float32)
    logits = logits + bc_ref[...].astype(jnp.float32)
    o_ref[...] = jax.nn.sigmoid(logits).astype(o_ref.dtype)  # (BB, C)


def _pick_batches_per_tile(B, S, target_rows):
    """Largest BB dividing B with BB*S <= target_rows and a legal block layout."""
    max_bb = max(1, target_rows // S)
    for bb in range(min(B, max_bb), 0, -1):
        # output block second-to-last dim must be 8-aligned or the full extent
        if B % bb == 0 and (bb == B or bb % 8 == 0):
            return bb
    return B  # fallback: whole problem in one tile (always legal)


def fcn_forward(x, params, *, target_rows=256):
    B, S, H = x.shape
    C = params['wc'].shape[1]
    BB = _pick_batches_per_tile(B, S, target_rows)
    TM = BB * S
    grid = (B // BB,)

    x2d = x.reshape(B * S, H)

    def const(shape):
        return pl.BlockSpec(shape, lambda i, _s=shape: (0,) * len(_s))

    # VMEM budget: double-buffered X tile + out tile + resident bf16 weights.
    est = (2 * TM * H * 4 + 2 * BB * C * 4
           + 3 * (H * H * 2 + 128 * 4) + H * C * 2 + 128 * 4)
    vmem_limit = int(min(max(4 * est, 16 << 20), 32 << 20))

    kernel = functools.partial(fcn_kernel, seq_len=S, batches_per_tile=BB)

    return pl.pallas_call(
        kernel,
        out_shape=jax.ShapeDtypeStruct((B, C), jnp.float32),
        grid=grid,
        in_specs=[
            pl.BlockSpec((TM, H), lambda i: (i, 0)),  # streamed X row tiles
            const((H, H)), const((1, H)),             # weights: constant block
            const((H, H)), const((1, H)),             #   -> DMA'd once, resident
            const((H, H)), const((1, H)),
            const((H, C)), const((1, C)),
        ],
        out_specs=pl.BlockSpec((BB, C), lambda i: (i, 0)),
        compiler_params=pltpu.CompilerParams(
            dimension_semantics=("parallel",),        # v7x megacore sharding
            vmem_limit_bytes=vmem_limit),
    )(x2d,
      params['w1'], params['b1'],
      params['w2'], params['b2'],
      params['w3'], params['b3'],
      params['wc'], params['bc'])


def init_params(key, hidden_units, classes_num):
    """Xavier-normal weights (bf16 storage, matching torch xavier_normal_), zero biases."""
    def xavier(k, fan_in, fan_out):
        std = math.sqrt(2.0 / (fan_in + fan_out))
        w = std * jax.random.normal(k, (fan_in, fan_out), dtype=jnp.float32)
        return w.astype(jnp.bfloat16)

    k1, k2, k3, kc = jax.random.split(key, 4)
    return {
        'w1': xavier(k1, hidden_units, hidden_units),
        'b1': jnp.zeros((1, hidden_units), jnp.float32),
        'w2': xavier(k2, hidden_units, hidden_units),
        'b2': jnp.zeros((1, hidden_units), jnp.float32),
        'w3': xavier(k3, hidden_units, hidden_units),
        'b3': jnp.zeros((1, hidden_units), jnp.float32),
        'wc': xavier(kc, hidden_units, classes_num),
        'bc': jnp.zeros((1, classes_num), jnp.float32),
    }


def fcn_reference(x, params):
    """Pure-JAX reference with identical numerics (bf16 matmul operands, f32 accum)."""
    def leaky(v):
        return jnp.where(v >= 0.0, v, 0.01 * v)

    h = x.astype(jnp.float32)
    for wk, bk in (('w1', 'b1'), ('w2', 'b2'), ('w3', 'b3')):
        y = jnp.einsum('bsh,hk->bsk', h.astype(jnp.bfloat16), params[wk],
                       preferred_element_type=jnp.float32)
        h = leaky(y + params[bk][None].astype(jnp.float32))
    pooled = jnp.mean(h + x.astype(jnp.float32), axis=1)
    logits = jnp.dot(pooled.astype(jnp.bfloat16), params['wc'],
                     preferred_element_type=jnp.float32)
    logits = logits + params['bc'].astype(jnp.float32)
    return jax.nn.sigmoid(logits)


if __name__ == "__main__":
    B, S, H, C = 2, 8, 32, 4        # batch, seq, hidden_units, classes_num
    key = jax.random.PRNGKey(0)
    kx, kp = jax.random.split(key)

    x = jax.random.normal(kx, (B, S, H), dtype=jnp.float32)
    params = init_params(kp, H, C)

    out = jax.block_until_ready(fcn_forward(x, params))
    ref = fcn_reference(x, params)

    assert out.shape == (B, C), out.shape
    assert jnp.allclose(out, ref, atol=2e-3, rtol=2e-3), (out, ref)
    print("KERNEL_OK")
</pallas_src>

<mosaic_0001>
module attributes {stable_mosaic.version = 11 : i64} {
  func.func @fcn_kernel(%arg0: i32, %arg1: memref<16x32xf32, #tpu.memory_space<vmem>>, %arg2: memref<32x32xbf16, #tpu.memory_space<vmem>>, %arg3: memref<1x32xf32, #tpu.memory_space<vmem>>, %arg4: memref<32x32xbf16, #tpu.memory_space<vmem>>, %arg5: memref<1x32xf32, #tpu.memory_space<vmem>>, %arg6: memref<32x32xbf16, #tpu.memory_space<vmem>>, %arg7: memref<1x32xf32, #tpu.memory_space<vmem>>, %arg8: memref<32x4xbf16, #tpu.memory_space<vmem>>, %arg9: memref<1x4xf32, #tpu.memory_space<vmem>>, %arg10: memref<2x4xf32, #tpu.memory_space<vmem>>) attributes {dimension_semantics = [#tpu.dimension_semantics<parallel>], iteration_bounds = array<i64: 1>, scalar_prefetch = 0 : i64, scratch_operands = 0 : i64, tpu.core_type = #tpu.core_type<tc>, window_params = [{transform_indices = @transform_0, window_bounds = array<i64: 16, 32>}, {pipeline_mode = #tpu.pipeline_mode<synchronous>, transform_indices = @transform_1, window_bounds = array<i64: 32, 32>}, {pipeline_mode = #tpu.pipeline_mode<synchronous>, transform_indices = @transform_2, window_bounds = array<i64: 1, 32>}, {pipeline_mode = #tpu.pipeline_mode<synchronous>, transform_indices = @transform_3, window_bounds = array<i64: 32, 32>}, {pipeline_mode = #tpu.pipeline_mode<synchronous>, transform_indices = @transform_4, window_bounds = array<i64: 1, 32>}, {pipeline_mode = #tpu.pipeline_mode<synchronous>, transform_indices = @transform_5, window_bounds = array<i64: 32, 32>}, {pipeline_mode = #tpu.pipeline_mode<synchronous>, transform_indices = @transform_6, window_bounds = array<i64: 1, 32>}, {pipeline_mode = #tpu.pipeline_mode<synchronous>, transform_indices = @transform_7, window_bounds = array<i64: 32, 4>}, {pipeline_mode = #tpu.pipeline_mode<synchronous>, transform_indices = @transform_8, window_bounds = array<i64: 1, 4>}, {transform_indices = @transform_9, window_bounds = array<i64: 2, 4>}]} {
    %c0 = arith.constant 0 : index
    %c0_0 = arith.constant 0 : index
    %0 = vector.load %arg1[%c0, %c0_0] : memref<16x32xf32, #tpu.memory_space<vmem>>, vector<16x32xf32>
    %1 = arith.truncf %0 : vector<16x32xf32> to vector<16x32xbf16>
    %c0_1 = arith.constant 0 : index
    %c0_2 = arith.constant 0 : index
    %2 = vector.load %arg2[%c0_1, %c0_2] : memref<32x32xbf16, #tpu.memory_space<vmem>>, vector<32x32xbf16>
    %cst = arith.constant dense<0.000000e+00> : vector<16x32xf32>
    %3 = tpu.matmul %1, %2, %cst {dimension_numbers = #tpu.dot_dimension_numbers<[1], [0], [0], [1], [0, 0, 1, 1], [], []>} : vector<16x32xbf16>, vector<32x32xbf16>, vector<16x32xf32> -> vector<16x32xf32>
    %c0_3 = arith.constant 0 : index
    %c0_4 = arith.constant 0 : index
    %4 = vector.load %arg3[%c0_3, %c0_4] : memref<1x32xf32, #tpu.memory_space<vmem>>, vector<1x32xf32>
    %5 = vector.broadcast %4 : vector<1x32xf32> to vector<16x32xf32>
    %6 = arith.addf %3, %5 : vector<16x32xf32>
    %cst_5 = arith.constant 0.000000e+00 : f32
    %7 = vector.broadcast %cst_5 : f32 to vector<16x32xf32>
    %8 = arith.cmpf oge, %6, %7 : vector<16x32xf32>
    %cst_6 = arith.constant 0.00999999977 : f32
    %9 = vector.broadcast %cst_6 : f32 to vector<16x32xf32>
    %10 = arith.mulf %9, %6 : vector<16x32xf32>
    %11 = arith.select %8, %6, %10 : vector<16x32xi1>, vector<16x32xf32>
    %12 = arith.truncf %11 : vector<16x32xf32> to vector<16x32xbf16>
    %c0_7 = arith.constant 0 : index
    %c0_8 = arith.constant 0 : index
    %13 = vector.load %arg4[%c0_7, %c0_8] : memref<32x32xbf16, #tpu.memory_space<vmem>>, vector<32x32xbf16>
    %cst_9 = arith.constant dense<0.000000e+00> : vector<16x32xf32>
    %14 = tpu.matmul %12, %13, %cst_9 {dimension_numbers = #tpu.dot_dimension_numbers<[1], [0], [0], [1], [0, 0, 1, 1], [], []>} : vector<16x32xbf16>, vector<32x32xbf16>, vector<16x32xf32> -> vector<16x32xf32>
    %c0_10 = arith.constant 0 : index
    %c0_11 = arith.constant 0 : index
    %15 = vector.load %arg5[%c0_10, %c0_11] : memref<1x32xf32, #tpu.memory_space<vmem>>, vector<1x32xf32>
    %16 = vector.broadcast %15 : vector<1x32xf32> to vector<16x32xf32>
    %17 = arith.addf %14, %16 : vector<16x32xf32>
    %cst_12 = arith.constant 0.000000e+00 : f32
    %18 = vector.broadcast %cst_12 : f32 to vector<16x32xf32>
    %19 = arith.cmpf oge, %17, %18 : vector<16x32xf32>
    %cst_13 = arith.constant 0.00999999977 : f32
    %20 = vector.broadcast %cst_13 : f32 to vector<16x32xf32>
    %21 = arith.mulf %20, %17 : vector<16x32xf32>
    %22 = arith.select %19, %17, %21 : vector<16x32xi1>, vector<16x32xf32>
    %23 = arith.truncf %22 : vector<16x32xf32> to vector<16x32xbf16>
    %c0_14 = arith.constant 0 : index
    %c0_15 = arith.constant 0 : index
    %24 = vector.load %arg6[%c0_14, %c0_15] : memref<32x32xbf16, #tpu.memory_space<vmem>>, vector<32x32xbf16>
    %cst_16 = arith.constant dense<0.000000e+00> : vector<16x32xf32>
    %25 = tpu.matmul %23, %24, %cst_16 {dimension_numbers = #tpu.dot_dimension_numbers<[1], [0], [0], [1], [0, 0, 1, 1], [], []>} : vector<16x32xbf16>, vector<32x32xbf16>, vector<16x32xf32> -> vector<16x32xf32>
    %c0_17 = arith.constant 0 : index
    %c0_18 = arith.constant 0 : index
    %26 = vector.load %arg7[%c0_17, %c0_18] : memref<1x32xf32, #tpu.memory_space<vmem>>, vector<1x32xf32>
    %27 = vector.broadcast %26 : vector<1x32xf32> to vector<16x32xf32>
    %28 = arith.addf %25, %27 : vector<16x32xf32>
    %cst_19 = arith.constant 0.000000e+00 : f32
    %29 = vector.broadcast %cst_19 : f32 to vector<16x32xf32>
    %30 = arith.cmpf oge, %28, %29 : vector<16x32xf32>
    %cst_20 = arith.constant 0.00999999977 : f32
    %31 = vector.broadcast %cst_20 : f32 to vector<16x32xf32>
    %32 = arith.mulf %31, %28 : vector<16x32xf32>
    %33 = arith.select %30, %28, %32 : vector<16x32xi1>, vector<16x32xf32>
    %34 = arith.addf %33, %0 : vector<16x32xf32>
    %35 = vector.shape_cast %34 : vector<16x32xf32> to vector<2x8x32xf32>
    %cst_21 = arith.constant dense<0.000000e+00> : vector<2x32xf32>
    %36 = vector.multi_reduction <add>, %35, %cst_21 [1] : vector<2x8x32xf32> to vector<2x32xf32>
    %cst_22 = arith.constant 1.250000e-01 : f32
    %37 = vector.broadcast %cst_22 : f32 to vector<2x32xf32>
    %38 = arith.mulf %36, %37 : vector<2x32xf32>
    %39 = arith.truncf %38 : vector<2x32xf32> to vector<2x32xbf16>
    %c0_23 = arith.constant 0 : index
    %c0_24 = arith.constant 0 : index
    %40 = vector.load %arg8[%c0_23, %c0_24] : memref<32x4xbf16, #tpu.memory_space<vmem>>, vector<32x4xbf16>
    %cst_25 = arith.constant dense<0.000000e+00> : vector<2x4xf32>
    %41 = tpu.matmul %39, %40, %cst_25 {dimension_numbers = #tpu.dot_dimension_numbers<[1], [0], [0], [1], [0, 0, 1, 1], [], []>} : vector<2x32xbf16>, vector<32x4xbf16>, vector<2x4xf32> -> vector<2x4xf32>
    %c0_26 = arith.constant 0 : index
    %c0_27 = arith.constant 0 : index
    %42 = vector.load %arg9[%c0_26, %c0_27] : memref<1x4xf32, #tpu.memory_space<vmem>>, vector<1x4xf32>
    %43 = vector.broadcast %42 : vector<1x4xf32> to vector<2x4xf32>
    %44 = arith.addf %41, %43 : vector<2x4xf32>
    %45 = arith.negf %44 : vector<2x4xf32>
    %46 = math.exp %45 : vector<2x4xf32>
    %cst_28 = arith.constant 1.000000e+00 : f32
    %47 = vector.broadcast %cst_28 : f32 to vector<2x4xf32>
    %48 = arith.addf %47, %46 : vector<2x4xf32>
    %49 = arith.divf %47, %48 : vector<2x4xf32>
    %c0_29 = arith.constant 0 : index
    %c0_30 = arith.constant 0 : index
    %50 = vector.load %arg10[%c0_29, %c0_30] : memref<2x4xf32, #tpu.memory_space<vmem>>, vector<2x4xf32>
    tpu.vector_store %arg10[%c0_29, %c0_30], %49 {strides = array<i32>} : memref<2x4xf32, #tpu.memory_space<vmem>>, vector<2x4xf32>,
    return
  }
  func.func @transform_0(%arg0: i32) -> (i32, i32) {
    %c0_i32 = arith.constant 0 : i32
    %c0_i32_0 = arith.constant 0 : i32
    return %arg0, %c0_i32 : i32, i32
  }
  func.func @transform_1(%arg0: i32) -> (i32, i32) {
    %c0_i32 = arith.constant 0 : i32
    %c0_i32_0 = arith.constant 0 : i32
    %c0_i32_1 = arith.constant 0 : i32
    return %c0_i32, %c0_i32_0 : i32, i32
  }
  func.func @transform_2(%arg0: i32) -> (i32, i32) {
    %c0_i32 = arith.constant 0 : i32
    %c0_i32_0 = arith.constant 0 : i32
    %c0_i32_1 = arith.constant 0 : i32
    return %c0_i32, %c0_i32_0 : i32, i32
  }
  func.func @transform_3(%arg0: i32) -> (i32, i32) {
    %c0_i32 = arith.constant 0 : i32
    %c0_i32_0 = arith.constant 0 : i32
    %c0_i32_1 = arith.constant 0 : i32
    return %c0_i32, %c0_i32_0 : i32, i32
  }
  func.func @transform_4(%arg0: i32) -> (i32, i32) {
    %c0_i32 = arith.constant 0 : i32
    %c0_i32_0 = arith.constant 0 : i32
    %c0_i32_1 = arith.constant 0 : i32
    return %c0_i32, %c0_i32_0 : i32, i32
  }
  func.func @transform_5(%arg0: i32) -> (i32, i32) {
    %c0_i32 = arith.constant 0 : i32
    %c0_i32_0 = arith.constant 0 : i32
    %c0_i32_1 = arith.constant 0 : i32
    return %c0_i32, %c0_i32_0 : i32, i32
  }
  func.func @transform_6(%arg0: i32) -> (i32, i32) {
    %c0_i32 = arith.constant 0 : i32
    %c0_i32_0 = arith.constant 0 : i32
    %c0_i32_1 = arith.constant 0 : i32
    return %c0_i32, %c0_i32_0 : i32, i32
  }
  func.func @transform_7(%arg0: i32) -> (i32, i32) {
    %c0_i32 = arith.constant 0 : i32
    %c0_i32_0 = arith.constant 0 : i32
    %c0_i32_1 = arith.constant 0 : i32
    return %c0_i32, %c0_i32_0 : i32, i32
  }
  func.func @transform_8(%arg0: i32) -> (i32, i32) {
    %c0_i32 = arith.constant 0 : i32
    %c0_i32_0 = arith.constant 0 : i32
    %c0_i32_1 = arith.constant 0 : i32
    return %c0_i32, %c0_i32_0 : i32, i32
  }
  func.func @transform_9(%arg0: i32) -> (i32, i32) {
    %c0_i32 = arith.constant 0 : i32
    %c0_i32_0 = arith.constant 0 : i32
    return %arg0, %c0_i32 : i32, i32
  }
}

</mosaic_0001>

<llo_original>
// kernel: tpu_custom_call.1
$region0: #{tpu_custom_call.1}
  #allocation0 [shape = 'u32[]', space=smem, size = 0x4, offset = 0x4, fixed_abs, tag = 'smem constant byte address 0x4 - core index']
  #allocation1 [shape = 'u32[144,128]{1,0:T(1,128)}', space=vmem, size = 0x12000, scoped, tag = 'internal scratch']
  %s0 = inlined_call_operand.vmem [shape: f32[16,32], index: 0, kind: input, shape index: {}]
  %s1 = inlined_call_operand.hbm [shape: bf16[32,32], index: 1, kind: input, shape index: {}]
  %s2 = inlined_call_operand.vmem [shape: f32[1,32], index: 2, kind: input, shape index: {}]
  %s3 = inlined_call_operand.hbm [shape: bf16[32,32], index: 3, kind: input, shape index: {}]
  %s4 = inlined_call_operand.vmem [shape: f32[1,32], index: 4, kind: input, shape index: {}]
  %s5 = inlined_call_operand.hbm [shape: bf16[32,32], index: 5, kind: input, shape index: {}]
  %s6 = inlined_call_operand.vmem [shape: f32[1,32], index: 6, kind: input, shape index: {}]
  %s7 = inlined_call_operand.vmem [shape: bf16[32,4], index: 7, kind: input, shape index: {}]
  %s8 = inlined_call_operand.vmem [shape: f32[1,4], index: 8, kind: input, shape index: {}]
  %s9 = inlined_call_operand.hbm [shape: f32[2,4], index: 9, kind: output, shape index: {}]
  %s10 = sld [smem:[#allocation0]]
  $region58: #{tpu_custom_call.1} parent=0
    _
  %s12 = ssub.s32 1, %s10
  %s13 = scalar_select 0, %s12, %s10
  $region1: #{tpu_custom_call.1} parent=0
    #allocation2 [shape = 'u8[8192]{0}', space=vmem, size = 0x2000, scoped, tag = 'input window, operand 1, single buffered']
    #allocation3 [shape = 's32[1]{0}', space=sflag, size = 0x4, scoped, tag = 'scoped memory for tpu_custom_call.1']
    #allocation4 [shape = 's32[1]{0}', space=sflag, size = 0x4, scoped, tag = 'scoped memory for tpu_custom_call.1']
    #allocation5 [shape = 'u8[8192]{0}', space=vmem, size = 0x2000, scoped, tag = 'input window, operand 3, single buffered']
    #allocation6 [shape = 's32[1]{0}', space=sflag, size = 0x4, scoped, tag = 'scoped memory for tpu_custom_call.1']
    #allocation7 [shape = 'u8[8192]{0}', space=vmem, size = 0x2000, scoped, tag = 'input window, operand 5, single buffered']
    #allocation8 [shape = 'u8[1024]{0}', space=vmem, size = 0x400, scoped, tag = 'output window, operand 0, single buffered']
    %14 = vsyncpa [#allocation3], 0
    %15 = vsyncpa [#allocation6], 0
    %16 = vsyncpa [#allocation4], 0
    // Predicated region
    $region2: #{tpu_custom_call.1} parent=1 // pred_check
      _
    $region3: #{tpu_custom_call.1} parent=1 // pred_check_branch
      %18 = sbr.rel (0) target = $region5
    $region4: #{tpu_custom_call.1} parent=1 // pred_region
      _
    $region5: #{tpu_custom_call.1} parent=1 // pred_fallthru
      _
    // Predicated region
    $region6: #{tpu_custom_call.1} parent=1 // pred_check
      _
    $region7: #{tpu_custom_call.1} parent=1 // pred_check_branch
      %20 = sbr.rel (0) target = $region9
    $region8: #{tpu_custom_call.1} parent=1 // pred_region
      %s22 = ssub.s32 256, 256
      %23 = vsyncadd [#allocation3], %s22
      %s24 = sshll.u32 [#allocation2], 4
      %s25 = int_to_ptr.vmem [resolvable:$true] %s24
      %30 = dma.hbm_to_vmem [thread:$0]  %s1, 256, %s25, [#allocation3], 64, 64, 4
    $region9: #{tpu_custom_call.1} parent=1 // pred_fallthru
      _
    // Predicated region
    $region10: #{tpu_custom_call.1} parent=1 // pred_check
      _
    $region11: #{tpu_custom_call.1} parent=1 // pred_check_branch
      %32 = sbr.rel (0) target = $region13
    $region12: #{tpu_custom_call.1} parent=1 // pred_region
      _
    $region13: #{tpu_custom_call.1} parent=1 // pred_fallthru
      _
    // Predicated region
    $region14: #{tpu_custom_call.1} parent=1 // pred_check
      _
    $region15: #{tpu_custom_call.1} parent=1 // pred_check_branch
      %34 = sbr.rel (0) target = $region17
    $region16: #{tpu_custom_call.1} parent=1 // pred_region
      %s36 = ssub.s32 256, 256
      %37 = vsyncadd [#allocation6], %s36
      %s38 = sshll.u32 [#allocation5], 4
      %s39 = int_to_ptr.vmem [resolvable:$true] %s38
      %44 = dma.hbm_to_vmem [thread:$0]  %s3, 256, %s39, [#allocation6], 64, 64, 4
    $region17: #{tpu_custom_call.1} parent=1 // pred_fallthru
      _
    // Predicated region
    $region18: #{tpu_custom_call.1} parent=1 // pred_check
      _
    $region19: #{tpu_custom_call.1} parent=1 // pred_check_branch
      %46 = sbr.rel (0) target = $region21
    $region20: #{tpu_custom_call.1} parent=1 // pred_region
      _
    $region21: #{tpu_custom_call.1} parent=1 // pred_fallthru
      _
    // Predicated region
    $region22: #{tpu_custom_call.1} parent=1 // pred_check
      _
    $region23: #{tpu_custom_call.1} parent=1 // pred_check_branch
      %48 = sbr.rel (0) target = $region25
    $region24: #{tpu_custom_call.1} parent=1 // pred_region
      %s50 = ssub.s32 256, 256
      %51 = vsyncadd [#allocation6], %s50
      %s52 = sshll.u32 [#allocation7], 4
      %s53 = int_to_ptr.vmem [resolvable:$true] %s52
      %58 = dma.hbm_to_vmem [thread:$0]  %s5, 256, %s53, [#allocation6], 64, 64, 4
    $region25: #{tpu_custom_call.1} parent=1 // pred_fallthru
      _
    // Predicated region
    $region26: #{tpu_custom_call.1} parent=1 // pred_check
      _
    $region27: #{tpu_custom_call.1} parent=1 // pred_check_branch
      %60 = sbr.rel (0) target = $region29
    $region28: #{tpu_custom_call.1} parent=1 // pred_region
      _
    $region29: #{tpu_custom_call.1} parent=1 // pred_fallthru
      _
    // Predicated region
    $region30: #{tpu_custom_call.1} parent=1 // pred_check
      _
    $region31: #{tpu_custom_call.1} parent=1 // pred_check_branch
      %62 = sbr.rel (0) target = $region33
    $region32: #{tpu_custom_call.1} parent=1 // pred_region
      _
    $region33: #{tpu_custom_call.1} parent=1 // pred_fallthru
      _
    // Predicated region
    $region34: #{tpu_custom_call.1} parent=1 // pred_check
      _
    $region35: #{tpu_custom_call.1} parent=1 // pred_check_branch
      %64 = sbr.rel (0) target = $region37
    $region36: #{tpu_custom_call.1} parent=1 // pred_region
      _
    $region37: #{tpu_custom_call.1} parent=1 // pred_fallthru
      _
    // Predicated region
    $region38: #{tpu_custom_call.1} parent=1 // pred_check
      _
    $region39: #{tpu_custom_call.1} parent=1 // pred_check_branch
      %66 = sbr.rel (0) target = $region41
    $region40: #{tpu_custom_call.1} parent=1 // pred_region
      %67 = dma.done [#allocation3], 256
    $region41: #{tpu_custom_call.1} parent=1 // pred_fallthru
      _
    // Predicated region
    $region42: #{tpu_custom_call.1} parent=1 // pred_check
      _
    $region43: #{tpu_custom_call.1} parent=1 // pred_check_branch
      %69 = sbr.rel (0) target = $region45
    $region44: #{tpu_custom_call.1} parent=1 // pred_region
      %70 = dma.done [#allocation6], 256
    $region45: #{tpu_custom_call.1} parent=1 // pred_fallthru
      _
    // Predicated region
    $region46: #{tpu_custom_call.1} parent=1 // pred_check
      _
    $region47: #{tpu_custom_call.1} parent=1 // pred_check_branch
      %72 = sbr.rel (0) target = $region49
    $region48: #{tpu_custom_call.1} parent=1 // pred_region
      %73 = dma.done [#allocation6], 256
    $region49: #{tpu_custom_call.1} parent=1 // pred_fallthru
      _
    %v75 = vld [vmem:[%s0] sm:$0xff]
    %v76 = vld [vmem:[%s0 + $0x8] sm:$0xff]
    %v77 = vpack.c.bf16 %v76, %v75
    %v78 = vld [vmem:[#allocation2] sm:$0xf]
    %v79 = vld [vmem:[#allocation2 + $0x4] sm:$0xf]
    %v80 = vld [vmem:[#allocation2 + $0x8] sm:$0xf]
    %v81 = vld [vmem:[#allocation2 + $0xc] sm:$0xf]
    %v82 = vld [vmem:[%s2] sm:$0x1]
    %v84 = vlaneseq
    %v85 = vshrl.u32 %v84, 7
    %v86 = vsub.s32 0, %v85
    %v87 = vrot.slane %v82, %v86
    %v93 = vunpack.c.l.b16 %v78
    %v94 = vunpack.c.l.b16 %v79
    %v95 = vunpack.c.l.b16 %v80
    %v96 = vunpack.c.l.b16 %v81
    %v97 = vpack.c.b16 %v94, %v93
    %v98 = vpack.c.b16 %v96, %v95
    %vm101 = vcmask 261120
    %v103 = vsel %vm101, %v77, 0
    %105 = vmatprep.subr.bf16.mxu0 0
    %106 = vmatpush1.bf16.msra.mxu0 0
    %107 = vmatprep.subr.bf16.mxu0 0
    %108 = vmatpush1.bf16.msra.mxu0 0
    %109 = vmatprep.subr.bf16.mxu0 0
    %110 = vmatpush1.bf16.msra.mxu0 0
    %111 = vmatprep.subr.bf16.mxu0 0
    %112 = vmatpush1.bf16.msra.mxu0 0
    %113 = vmatprep.subr.bf16.mxu0 0
    %114 = vmatpush1.bf16.msra.mxu0 0
    %115 = vmatprep.subr.bf16.mxu0 0
    %116 = vmatpush1.bf16.msra.mxu0 0
    %117 = vmatprep.subr.bf16.mxu0 0
    %118 = vmatpush1.bf16.msra.mxu0 %v98
    %119 = vmatprep.subr.bf16.mxu0 0
    %120 = vmatpush1.bf16.msra.mxu0 %v97
    %121 = vmatprep.subr.bf16.mxu0 0
    %122 = vmatpush2.bf16.msra.mxu0 0
    %123 = vmatprep.subr.bf16.mxu0 0
    %124 = vmatpush2.bf16.msra.mxu0 0
    %125 = vmatprep.subr.bf16.mxu0 0
    %126 = vmatpush2.bf16.msra.mxu0 0
    %127 = vmatprep.subr.bf16.mxu0 0
    %128 = vmatpush2.bf16.msra.mxu0 0
    %129 = vmatprep.subr.bf16.mxu0 0
    %130 = vmatpush2.bf16.msra.mxu0 0
    %131 = vmatprep.subr.bf16.mxu0 0
    %132 = vmatpush2.bf16.msra.mxu0 0
    %133 = vmatprep.subr.bf16.mxu0 0
    %134 = vmatpush2.bf16.msra.mxu0 0
    %135 = vmatprep.subr.bf16.mxu0 0
    %136 = vmatpush2.bf16.msra.mxu0 0
    %137 = vmatprep.mubr.bf16.mxu0 0
    %138 = vmatmul.mubr.bf16.gmra.mxu0 %v103
    %v139 = vpop.f32.mrf.mxu0
    %v140 = vadd.f32 %v87, %v139
    %v141 = vpop.f32.mrf.mxu0
    %v142 = vpop.f32.mrf.mxu0
    %v143 = vadd.f32 %v87, %v142
    %v144 = vpop.f32.mrf.mxu0
    %145 = vdwg.mxu0
    %vm146 = vcmp.ge.f32.partialorder %v140, 0.0
    %vm147 = vcmp.ge.f32.partialorder %v143, 0.0
    %v148 = vmul.f32 %v140, 0.01
    %v149 = vmul.f32 %v143, 0.01
    %v150 = vsel %vm146, %v140, %v148
    %v151 = vsel %vm147, %v143, %v149
    %v152 = vpack.c.bf16 %v151, %v150
    %v153 = vld [vmem:[#allocation5] sm:$0xf]
    %v154 = vld [vmem:[#allocation5 + $0x4] sm:$0xf]
    %v155 = vld [vmem:[#allocation5 + $0x8] sm:$0xf]
    %v156 = vld [vmem:[#allocation5 + $0xc] sm:$0xf]
    %v157 = vld [vmem:[%s4] sm:$0x1]
    %v159 = vlaneseq
    %v160 = vshrl.u32 %v159, 7
    %v161 = vsub.s32 0, %v160
    %v162 = vrot.slane %v157, %v161
    %v168 = vunpack.c.l.b16 %v153
    %v169 = vunpack.c.l.b16 %v154
    %v170 = vunpack.c.l.b16 %v155
    %v171 = vunpack.c.l.b16 %v156
    %v172 = vpack.c.b16 %v169, %v168
    %v173 = vpack.c.b16 %v171, %v170
    %v177 = vsel %vm101, %v152, 0
    %179 = vmatprep.subr.bf16.mxu0 0
    %180 = vmatpush1.bf16.msra.mxu0 0
    %181 = vmatprep.subr.bf16.mxu0 0
    %182 = vmatpush1.bf16.msra.mxu0 0
    %183 = vmatprep.subr.bf16.mxu0 0
    %184 = vmatpush1.bf16.msra.mxu0 0
    %185 = vmatprep.subr.bf16.mxu0 0
    %186 = vmatpush1.bf16.msra.mxu0 0
    %187 = vmatprep.subr.bf16.mxu0 0
    %188 = vmatpush1.bf16.msra.mxu0 0
    %189 = vmatprep.subr.bf16.mxu0 0
    %190 = vmatpush1.bf16.msra.mxu0 0
    %191 = vmatprep.subr.bf16.mxu0 0
    %192 = vmatpush1.bf16.msra.mxu0 %v173
    %193 = vmatprep.subr.bf16.mxu0 0
    %194 = vmatpush1.bf16.msra.mxu0 %v172
    %195 = vmatprep.subr.bf16.mxu0 0
    %196 = vmatpush2.bf16.msra.mxu0 0
    %197 = vmatprep.subr.bf16.mxu0 0
    %198 = vmatpush2.bf16.msra.mxu0 0
    %199 = vmatprep.subr.bf16.mxu0 0
    %200 = vmatpush2.bf16.msra.mxu0 0
    %201 = vmatprep.subr.bf16.mxu0 0
    %202 = vmatpush2.bf16.msra.mxu0 0
    %203 = vmatprep.subr.bf16.mxu0 0
    %204 = vmatpush2.bf16.msra.mxu0 0
    %205 = vmatprep.subr.bf16.mxu0 0
    %206 = vmatpush2.bf16.msra.mxu0 0
    %207 = vmatprep.subr.bf16.mxu0 0
    %208 = vmatpush2.bf16.msra.mxu0 0
    %209 = vmatprep.subr.bf16.mxu0 0
    %210 = vmatpush2.bf16.msra.mxu0 0
    %211 = vmatprep.mubr.bf16.mxu0 0
    %212 = vmatmul.mubr.bf16.gmra.mxu0 %v177
    %v213 = vpop.f32.mrf.mxu0
    %v214 = vadd.f32 %v162, %v213
    %v215 = vpop.f32.mrf.mxu0
    %v216 = vpop.f32.mrf.mxu0
    %v217 = vadd.f32 %v162, %v216
    %v218 = vpop.f32.mrf.mxu0
    %219 = vdwg.mxu0
    %vm220 = vcmp.ge.f32.partialorder %v214, 0.0
    %vm221 = vcmp.ge.f32.partialorder %v217, 0.0
    %v222 = vmul.f32 %v214, 0.01
    %v223 = vmul.f32 %v217, 0.01
    %v224 = vsel %vm220, %v214, %v222
    %v225 = vsel %vm221, %v217, %v223
    %v226 = vpack.c.bf16 %v225, %v224
    %v227 = vld [vmem:[#allocation7] sm:$0xf]
    %v228 = vld [vmem:[#allocation7 + $0x4] sm:$0xf]
    %v229 = vld [vmem:[#allocation7 + $0x8] sm:$0xf]
    %v230 = vld [vmem:[#allocation7 + $0xc] sm:$0xf]
    %v231 = vld [vmem:[%s6] sm:$0x1]
    %v233 = vlaneseq
    %v234 = vshrl.u32 %v233, 7
    %v235 = vsub.s32 0, %v234
    %v236 = vrot.slane %v231, %v235
    %v242 = vunpack.c.l.b16 %v227
    %v243 = vunpack.c.l.b16 %v228
    %v244 = vunpack.c.l.b16 %v229
    %v245 = vunpack.c.l.b16 %v230
    %v246 = vpack.c.b16 %v243, %v242
    %v247 = vpack.c.b16 %v245, %v244
    %v251 = vsel %vm101, %v226, 0
    %253 = vmatprep.subr.bf16.mxu0 0
    %254 = vmatpush1.bf16.msra.mxu0 0
    %255 = vmatprep.subr.bf16.mxu0 0
    %256 = vmatpush1.bf16.msra.mxu0 0
    %257 = vmatprep.subr.bf16.mxu0 0
    %258 = vmatpush1.bf16.msra.mxu0 0
    %259 = vmatprep.subr.bf16.mxu0 0
    %260 = vmatpush1.bf16.msra.mxu0 0
    %261 = vmatprep.subr.bf16.mxu0 0
    %262 = vmatpush1.bf16.msra.mxu0 0
    %263 = vmatprep.subr.bf16.mxu0 0
    %264 = vmatpush1.bf16.msra.mxu0 0
    %265 = vmatprep.subr.bf16.mxu0 0
    %266 = vmatpush1.bf16.msra.mxu0 %v247
    %267 = vmatprep.subr.bf16.mxu0 0
    %268 = vmatpush1.bf16.msra.mxu0 %v246
    %269 = vmatprep.subr.bf16.mxu0 0
    %270 = vmatpush2.bf16.msra.mxu0 0
    %271 = vmatprep.subr.bf16.mxu0 0
    %272 = vmatpush2.bf16.msra.mxu0 0
    %273 = vmatprep.subr.bf16.mxu0 0
    %274 = vmatpush2.bf16.msra.mxu0 0
    %275 = vmatprep.subr.bf16.mxu0 0
    %276 = vmatpush2.bf16.msra.mxu0 0
    %277 = vmatprep.subr.bf16.mxu0 0
    %278 = vmatpush2.bf16.msra.mxu0 0
    %279 = vmatprep.subr.bf16.mxu0 0
    %280 = vmatpush2.bf16.msra.mxu0 0
    %281 = vmatprep.subr.bf16.mxu0 0
    %282 = vmatpush2.bf16.msra.mxu0 0
    %283 = vmatprep.subr.bf16.mxu0 0
    %284 = vmatpush2.bf16.msra.mxu0 0
    %285 = vmatprep.mubr.bf16.mxu0 0
    %286 = vmatmul.mubr.bf16.gmra.mxu0 %v251
    %v287 = vpop.f32.mrf.mxu0
    %v288 = vadd.f32 %v236, %v287
    %v289 = vpop.f32.mrf.mxu0
    %v290 = vpop.f32.mrf.mxu0
    %v291 = vadd.f32 %v236, %v290
    %v292 = vpop.f32.mrf.mxu0
    %293 = vdwg.mxu0
    %vm294 = vcmp.ge.f32.partialorder %v288, 0.0
    %vm295 = vcmp.ge.f32.partialorder %v291, 0.0
    %v296 = vmul.f32 %v288, 0.01
    %v297 = vmul.f32 %v291, 0.01
    %v298 = vsel %vm294, %v288, %v296
    %v299 = vsel %vm295, %v291, %v297
    %v300 = vadd.f32 %v298, %v75
    %v301 = vadd.f32 %v299, %v76
    %v302 = vsel %vm101, %v300, 0.0
    %v303 = vrot.slane %v302, 4
    %v304 = vadd.f32 %v302, %v303
    %v305 = vrot.slane %v304, 2
    %v306 = vadd.f32 %v304, %v305
    %v307 = vrot.slane %v306, 1
    %v308 = vadd.f32 %v306, %v307
    %v309 = vsel %vm101, %v301, 0.0
    %v310 = vrot.slane %v309, 4
    %v311 = vadd.f32 %v309, %v310
    %v312 = vrot.slane %v311, 2
    %v313 = vadd.f32 %v311, %v312
    %v314 = vrot.slane %v313, 1
    %v315 = vadd.f32 %v313, %v314
    %v316 = vmul.f32 %v308, 0.125
    %v317 = vmul.f32 %v315, 0.125
    %v318 = vpack.c.bf16 %v316, %v316
    %v319 = vpack.c.bf16 %v317, %v317
    %v320 = vld [vmem:[%s7] sm:$0xf]
    %v321 = vld [vmem:[%s7 + $0x4] sm:$0xf]
    %v322 = vld [vmem:[%s7 + $0x8] sm:$0xf]
    %v323 = vld [vmem:[%s7 + $0xc] sm:$0xf]
    %v324 = vld [vmem:[%s8] sm:$0x1]
    %v326 = vlaneseq
    %v327 = vshrl.u32 %v326, 7
    %v328 = vsub.s32 0, %v327
    %v329 = vrot.slane %v324, %v328
    %v333 = vunpack.c.l.b16 %v318
    %v334 = vunpack.c.l.b16 %v319
    %vm335 = vcmask 1041409
    %v336 = vsel %vm335, %v334, %v333
    %v337 = vpack.c.b16 %v336, %v336
    %v342 = vunpack.c.l.b16 %v320
    %v343 = vunpack.c.l.b16 %v321
    %v344 = vunpack.c.l.b16 %v322
    %v345 = vunpack.c.l.b16 %v323
    %v346 = vpack.c.b16 %v343, %v342
    %v347 = vpack.c.b16 %v345, %v344
    %v351 = vsel %vm101, %v337, 0
    %353 = vmatprep.subr.bf16.mxu0 0
    %354 = vmatpush1.bf16.msra.mxu0 0
    %355 = vmatprep.subr.bf16.mxu0 0
    %356 = vmatpush1.bf16.msra.mxu0 0
    %357 = vmatprep.subr.bf16.mxu0 0
    %358 = vmatpush1.bf16.msra.mxu0 0
    %359 = vmatprep.subr.bf16.mxu0 0
    %360 = vmatpush1.bf16.msra.mxu0 0
    %361 = vmatprep.subr.bf16.mxu0 0
    %362 = vmatpush1.bf16.msra.mxu0 0
    %363 = vmatprep.subr.bf16.mxu0 0
    %364 = vmatpush1.bf16.msra.mxu0 0
    %365 = vmatprep.subr.bf16.mxu0 0
    %366 = vmatpush1.bf16.msra.mxu0 %v347
    %367 = vmatprep.subr.bf16.mxu0 0
    %368 = vmatpush1.bf16.msra.mxu0 %v346
    %369 = vmatprep.subr.bf16.mxu0 0
    %370 = vmatpush2.bf16.msra.mxu0 0
    %371 = vmatprep.subr.bf16.mxu0 0
    %372 = vmatpush2.bf16.msra.mxu0 0
    %373 = vmatprep.subr.bf16.mxu0 0
    %374 = vmatpush2.bf16.msra.mxu0 0
    %375 = vmatprep.subr.bf16.mxu0 0
    %376 = vmatpush2.bf16.msra.mxu0 0
    %377 = vmatprep.subr.bf16.mxu0 0
    %378 = vmatpush2.bf16.msra.mxu0 0
    %379 = vmatprep.subr.bf16.mxu0 0
    %380 = vmatpush2.bf16.msra.mxu0 0
    %381 = vmatprep.subr.bf16.mxu0 0
    %382 = vmatpush2.bf16.msra.mxu0 0
    %383 = vmatprep.subr.bf16.mxu0 0
    %384 = vmatpush2.bf16.msra.mxu0 0
    %385 = vmatprep.mubr.bf16.mxu0 0
    %386 = vmatmul.mubr.bf16.gmra.mxu0 %v351
    %v387 = vpop.f32.mrf.mxu0
    %v388 = vadd.f32 %v329, %v387
    %v389 = vpop.f32.mrf.mxu0
    %v390 = vpop.f32.mrf.mxu0
    %v391 = vpop.f32.mrf.mxu0
    %392 = vdwg.mxu0
    %v393 = vxor.u32 %v388, 2147483648
    %v394 = vmul.f32 %v393, 1.442695
    %v395 = vpow.pop %v394
    %v396 = vadd.f32 %v395, 1.0
    %v397 = vrcp.pop %v396
    %v398 = vmul.f32 1.0, %v397
    %vm399 = vcmask 25600
    %400 = vst.msk [vmem:[#allocation8] sm:$0x3] %vm399, %v398
    // Predicated region
    $region50: #{tpu_custom_call.1} parent=1 // pred_check
      _
    $region51: #{tpu_custom_call.1} parent=1 // pred_check_branch
      %402 = sbr.rel (0) target = $region53
    $region52: #{tpu_custom_call.1} parent=1 // pred_region
      %s404 = ssub.s32 32, 32
      %405 = vsyncadd [#allocation4], %s404
      %s407 = sshll.u32 [#allocation8], 4
      %s408 = int_to_ptr.vmem [resolvable:$true] %s407
      %410 = dma.vmem_to_hbm [thread:$0]  %s408, 32, %s9, [#allocation4]
    $region53: #{tpu_custom_call.1} parent=1 // pred_fallthru
      _
    // Predicated region
    $region54: #{tpu_custom_call.1} parent=1 // pred_check
      _
    $region55: #{tpu_custom_call.1} parent=1 // pred_check_branch
      %412 = sbr.rel (0) target = $region57
    $region56: #{tpu_custom_call.1} parent=1 // pred_region
      %413 = dma.done [#allocation4], 32
    $region57: #{tpu_custom_call.1} parent=1 // pred_fallthru
      _
    %414 = vsyncpa [#allocation3], 1
    %415 = vsyncpa [#allocation6], 1
    %416 = vsyncpa [#allocation4], 1

</llo_original>
